<compile_context>
chip_gen: v7x
topology: tpu7x:2x2x1
jax: 0.10.0
libtpu: 0.0.40
codegen_flags: <defaults>
</compile_context>

<pallas_src>
import jax
import jax.numpy as jnp
from jax.experimental import pallas as pl
from jax.experimental.pallas import tpu as pltpu

_LANES = 128
_TILE_R = 2048          # 2048 x 128 x 4B = 1 MiB per f32 buffer
_GOLDEN = 0x9E3779B9    # odd 32-bit constant for seed mixing


def _poisson_kernel(seed_ref, x_ref, out_ref):
    tile_r, lanes = x_ref.shape

    # Global linear index of every element in this tile (uint32, wraps OK).
    base = (pl.program_id(0) * tile_r).astype(jnp.uint32)
    row = jax.lax.broadcasted_iota(jnp.int32, (tile_r, lanes), 0).astype(jnp.uint32)
    col = jax.lax.broadcasted_iota(jnp.int32, (tile_r, lanes), 1).astype(jnp.uint32)
    idx = (base + row) * jnp.uint32(lanes) + col

    # Counter-based hash PRNG: mix seed, then two finalizer rounds.
    seed = seed_ref[0].astype(jnp.uint32)
    h = idx ^ (seed * jnp.uint32(_GOLDEN))
    for m1, m2 in ((0x7FEB352D, 0x846CA68B), (0x85EBCA6B, 0xC2B2AE35)):
        h = h ^ (h >> 16)
        h = h * jnp.uint32(m1)
        h = h ^ (h >> 15)
        h = h * jnp.uint32(m2)
        h = h ^ (h >> 16)

    # Top 24 bits -> uniform in [0, 1) exactly representable in f32.
    r24 = (h >> 8).astype(jnp.int32)                       # values in [0, 2^24)
    u = r24.astype(jnp.float32) * jnp.float32(1.0 / (1 << 24))

    # Fire with probability x  (rand <= x).
    out_ref[...] = (u <= x_ref[...].astype(jnp.float32)).astype(out_ref.dtype)


def poisson_encode(x: jax.Array, seed: int = 0) -> jax.Array:
    """Poisson-encode x (values in [0,1]) into binary spikes, same shape/dtype."""
    orig_shape = x.shape
    orig_dtype = x.dtype
    total = x.size

    # Flatten to a lane-dense 2-D view [rows, 128].  Pad only if the element
    # count is not already a multiple of 8*128 (fast path: zero-copy reshape).
    pad_to = ((total + 8 * _LANES - 1) // (8 * _LANES)) * (8 * _LANES)
    padded = pad_to != total
    x_flat = jnp.reshape(x, (-1,))
    if padded:
        x_flat = jnp.pad(x_flat, (0, pad_to - total))
    rows = pad_to // _LANES
    x2d = jnp.reshape(x_flat, (rows, _LANES))

    tile_r = min(_TILE_R, rows)          # rows is always a multiple of 8
    grid = (pl.cdiv(rows, tile_r),)

    seed_arr = jnp.asarray([seed], dtype=jnp.int32)
    itemsize = jnp.dtype(orig_dtype).itemsize

    out2d = pl.pallas_call(
        _poisson_kernel,
        out_shape=jax.ShapeDtypeStruct((rows, _LANES), orig_dtype),
        grid=grid,
        in_specs=[
            pl.BlockSpec(memory_space=pltpu.SMEM),              # seed scalar
            pl.BlockSpec((tile_r, _LANES), lambda i: (i, 0)),   # x tile (native dtype)
        ],
        out_specs=pl.BlockSpec((tile_r, _LANES), lambda i: (i, 0)),
        compiler_params=pltpu.CompilerParams(
            dimension_semantics=("parallel",),                  # tiles independent
        ),
        cost_estimate=pl.CostEstimate(
            flops=rows * _LANES,
            transcendentals=0,
            bytes_accessed=2 * rows * _LANES * itemsize,
        ),
    )(seed_arr, x2d)

    out_flat = jnp.reshape(out2d, (-1,))
    if padded:
        out_flat = out_flat[:total]
    return jnp.reshape(out_flat, orig_shape)


if __name__ == "__main__":
    key = jax.random.PRNGKey(0)
    # NCHW input, values in [0, 1] as required by PoissonEncoder.
    x = jax.random.uniform(key, (2, 4, 16, 16), dtype=jnp.float32)

    spikes = poisson_encode(x, seed=0)
    spikes = jax.block_until_ready(spikes)

    # Forward-semantics sanity checks.
    assert spikes.shape == x.shape
    assert spikes.dtype == x.dtype
    vals = jnp.unique(spikes)
    assert bool(jnp.all((vals == 0.0) | (vals == 1.0))), "spikes must be binary"
    # Mean firing rate tracks mean(x)  (Bernoulli/Poisson rate coding).
    assert abs(float(spikes.mean()) - float(x.mean())) < 0.1
    # Higher intensity -> higher firing probability.
    hi = float(spikes[x > 0.75].mean())
    lo = float(spikes[x < 0.25].mean())
    assert hi > lo, "firing rate must increase with input intensity"

    print("KERNEL_OK")
</pallas_src>

<mosaic_0001>
module attributes {stable_mosaic.version = 11 : i64} {
  func.func @_poisson_kernel(%arg0: i32, %arg1: memref<1xi32, #tpu.memory_space<smem>>, %arg2: memref<16x128xf32, #tpu.memory_space<vmem>>, %arg3: memref<16x128xf32, #tpu.memory_space<vmem>>) attributes {dimension_semantics = [#tpu.dimension_semantics<parallel>], iteration_bounds = array<i64: 1>, scalar_prefetch = 0 : i64, scratch_operands = 0 : i64, tpu.core_type = #tpu.core_type<tc>, window_params = [{transform_indices = @transform_0, window_bounds = array<i64: 1>}, {transform_indices = @transform_1, window_bounds = array<i64: 16, 128>}, {transform_indices = @transform_2, window_bounds = array<i64: 16, 128>}]} {
    %c16_i32 = arith.constant 16 : i32
    %0 = arith.muli %arg0, %c16_i32 : i32
    %1 = tpu.iota {dimensions = array<i32: 0>} : vector<16x128xi32>
    %2 = tpu.iota {dimensions = array<i32: 1>} : vector<16x128xi32>
    %3 = vector.broadcast %0 : i32 to vector<16x128xi32>
    %4 = arith.addi %3, %1 : vector<16x128xi32>
    %c128_i32 = arith.constant 128 : i32
    %5 = vector.broadcast %c128_i32 : i32 to vector<16x128xi32>
    %6 = arith.muli %4, %5 : vector<16x128xi32>
    %7 = arith.addi %6, %2 : vector<16x128xi32>
    %c0 = arith.constant 0 : index
    %8 = memref.load %arg1[%c0] : memref<1xi32, #tpu.memory_space<smem>>
    %c-1640531527_i32 = arith.constant -1640531527 : i32
    %9 = arith.muli %8, %c-1640531527_i32 : i32
    %10 = vector.broadcast %9 : i32 to vector<16x128xi32>
    %11 = arith.xori %7, %10 : vector<16x128xi32>
    %c16_i32_0 = arith.constant 16 : i32
    %12 = vector.broadcast %c16_i32_0 : i32 to vector<16x128xi32>
    %13 = arith.shrui %11, %12 : vector<16x128xi32>
    %14 = arith.xori %11, %13 : vector<16x128xi32>
    %c2146121005_i32 = arith.constant 2146121005 : i32
    %15 = vector.broadcast %c2146121005_i32 : i32 to vector<16x128xi32>
    %16 = arith.muli %14, %15 : vector<16x128xi32>
    %c15_i32 = arith.constant 15 : i32
    %17 = vector.broadcast %c15_i32 : i32 to vector<16x128xi32>
    %18 = arith.shrui %16, %17 : vector<16x128xi32>
    %19 = arith.xori %16, %18 : vector<16x128xi32>
    %c-2073254261_i32 = arith.constant -2073254261 : i32
    %20 = vector.broadcast %c-2073254261_i32 : i32 to vector<16x128xi32>
    %21 = arith.muli %19, %20 : vector<16x128xi32>
    %c16_i32_1 = arith.constant 16 : i32
    %22 = vector.broadcast %c16_i32_1 : i32 to vector<16x128xi32>
    %23 = arith.shrui %21, %22 : vector<16x128xi32>
    %24 = arith.xori %21, %23 : vector<16x128xi32>
    %c16_i32_2 = arith.constant 16 : i32
    %25 = vector.broadcast %c16_i32_2 : i32 to vector<16x128xi32>
    %26 = arith.shrui %24, %25 : vector<16x128xi32>
    %27 = arith.xori %24, %26 : vector<16x128xi32>
    %c-2048144789_i32 = arith.constant -2048144789 : i32
    %28 = vector.broadcast %c-2048144789_i32 : i32 to vector<16x128xi32>
    %29 = arith.muli %27, %28 : vector<16x128xi32>
    %c15_i32_3 = arith.constant 15 : i32
    %30 = vector.broadcast %c15_i32_3 : i32 to vector<16x128xi32>
    %31 = arith.shrui %29, %30 : vector<16x128xi32>
    %32 = arith.xori %29, %31 : vector<16x128xi32>
    %c-1028477387_i32 = arith.constant -1028477387 : i32
    %33 = vector.broadcast %c-1028477387_i32 : i32 to vector<16x128xi32>
    %34 = arith.muli %32, %33 : vector<16x128xi32>
    %c16_i32_4 = arith.constant 16 : i32
    %35 = vector.broadcast %c16_i32_4 : i32 to vector<16x128xi32>
    %36 = arith.shrui %34, %35 : vector<16x128xi32>
    %37 = arith.xori %34, %36 : vector<16x128xi32>
    %c8_i32 = arith.constant 8 : i32
    %38 = vector.broadcast %c8_i32 : i32 to vector<16x128xi32>
    %39 = arith.shrui %37, %38 : vector<16x128xi32>
    %40 = arith.sitofp %39 : vector<16x128xi32> to vector<16x128xf32>
    %cst = arith.constant 5.96046448E-8 : f32
    %41 = vector.broadcast %cst : f32 to vector<16x128xf32>
    %42 = arith.mulf %40, %41 : vector<16x128xf32>
    %c0_5 = arith.constant 0 : index
    %c0_6 = arith.constant 0 : index
    %43 = vector.load %arg2[%c0_5, %c0_6] : memref<16x128xf32, #tpu.memory_space<vmem>>, vector<16x128xf32>
    %44 = arith.cmpf ole, %42, %43 : vector<16x128xf32>
    %45 = arith.extui %44 : vector<16x128xi1> to vector<16x128xi32>
    %46 = arith.sitofp %45 : vector<16x128xi32> to vector<16x128xf32>
    %c0_7 = arith.constant 0 : index
    %c0_8 = arith.constant 0 : index
    %47 = vector.load %arg3[%c0_7, %c0_8] : memref<16x128xf32, #tpu.memory_space<vmem>>, vector<16x128xf32>
    tpu.vector_store %arg3[%c0_7, %c0_8], %46 {strides = array<i32>} : memref<16x128xf32, #tpu.memory_space<vmem>>, vector<16x128xf32>,
    return
  }
  func.func @transform_0(%arg0: i32) -> i32 {
    %c0_i32 = arith.constant 0 : i32
    %c0_i32_0 = arith.constant 0 : i32
    return %c0_i32 : i32
  }
  func.func @transform_1(%arg0: i32) -> (i32, i32) {
    %c0_i32 = arith.constant 0 : i32
    %c0_i32_0 = arith.constant 0 : i32
    return %arg0, %c0_i32 : i32, i32
  }
  func.func @transform_2(%arg0: i32) -> (i32, i32) {
    %c0_i32 = arith.constant 0 : i32
    %c0_i32_0 = arith.constant 0 : i32
    return %arg0, %c0_i32 : i32, i32
  }
}

</mosaic_0001>

<llo_original>
// kernel: tpu_custom_call.1
$region0: #{tpu_custom_call.1}
  #allocation0 [shape = 'u32[]', space=smem, size = 0x4, offset = 0x4, fixed_abs, tag = 'smem constant byte address 0x4 - core index']
  #allocation1 [shape = 'u32[144,128]{1,0:T(1,128)}', space=vmem, size = 0x12000, scoped, tag = 'internal scratch']
  #allocation2 [shape = 's32[1]{0:T(128)S(6)}', space=smem, size = 0x200, scoped, tag = 'scoped memory for tpu_custom_call.1']
  %s0 = inlined_call_operand.<no memory space> [shape: s32[1], index: 0, kind: input, shape index: {}]
  %s1 = inlined_call_operand.hbm [shape: f32[16,128], index: 1, kind: input, shape index: {}]
  %s2 = inlined_call_operand.hbm [shape: f32[16,128], index: 2, kind: output, shape index: {}]
  %s3 = sld [smem:[#allocation0]]
  $region22: #{tpu_custom_call.1} parent=0
    _
  %s5 = ssub.s32 1, %s3
  %s6 = scalar_select 0, %s5, %s3
  %7 = sst [smem:[#allocation2]] %s0
  $region1: #{tpu_custom_call.1} parent=0
    #allocation3 [shape = 'u8[8192]{0}', space=vmem, size = 0x2000, scoped, tag = 'input window, operand 1, single buffered']
    #allocation4 [shape = 's32[1]{0}', space=sflag, size = 0x4, scoped, tag = 'scoped memory for tpu_custom_call.1']
    #allocation5 [shape = 's32[1]{0}', space=sflag, size = 0x4, scoped, tag = 'scoped memory for tpu_custom_call.1']
    #allocation6 [shape = 'u8[8192]{0}', space=vmem, size = 0x2000, scoped, tag = 'output window, operand 0, single buffered']
    %8 = vsyncpa [#allocation4], 0
    %9 = vsyncpa [#allocation5], 0
    // Predicated region
    $region2: #{tpu_custom_call.1} parent=1 // pred_check
      _
    $region3: #{tpu_custom_call.1} parent=1 // pred_check_branch
      %11 = sbr.rel (0) target = $region5
    $region4: #{tpu_custom_call.1} parent=1 // pred_region
      _
    $region5: #{tpu_custom_call.1} parent=1 // pred_fallthru
      _
    // Predicated region
    $region6: #{tpu_custom_call.1} parent=1 // pred_check
      _
    $region7: #{tpu_custom_call.1} parent=1 // pred_check_branch
      %13 = sbr.rel (0) target = $region9
    $region8: #{tpu_custom_call.1} parent=1 // pred_region
      %s15 = ssub.s32 256, 256
      %16 = vsyncadd [#allocation4], %s15
      %s17 = sshll.u32 [#allocation3], 4
      %s18 = int_to_ptr.vmem [resolvable:$true] %s17
      %23 = dma.hbm_to_vmem [thread:$0]  %s1, 256, %s18, [#allocation4], 128, 128, 8
    $region9: #{tpu_custom_call.1} parent=1 // pred_fallthru
      _
    // Predicated region
    $region10: #{tpu_custom_call.1} parent=1 // pred_check
      _
    $region11: #{tpu_custom_call.1} parent=1 // pred_check_branch
      %25 = sbr.rel (0) target = $region13
    $region12: #{tpu_custom_call.1} parent=1 // pred_region
      %26 = dma.done [#allocation4], 256
    $region13: #{tpu_custom_call.1} parent=1 // pred_fallthru
      _
    %s27 = smul.u32 0, 16
    %v28 = vlaneseq
    %v29 = vshrl.u32 %v28, 7
    %v30 = vadd.s32 %v29, 8
    %v31 = vlaneseq
    %v32 = vand.u32 %v31, 127
    %v33 = vstv %s27
    %v34 = vadd.s32 %v33, %v29
    %v35 = vadd.s32 %v33, %v30
    %v36 = vmul.u32 %v34, 128
    %v37 = vmul.u32 %v35, 128
    %v38 = vadd.s32 %v36, %v32
    %v39 = vadd.s32 %v37, %v32
    %s40 = sld [smem:[#allocation2]]
    %s41 = smul.u32 %s40, 2654435769
    %v42 = vstv %s41
    %v43 = vxor.u32 %v38, %v42
    %v44 = vxor.u32 %v39, %v42
    %v45 = vshrl.u32 %v43, 16
    %v46 = vshrl.u32 %v44, 16
    %v47 = vxor.u32 %v43, %v45
    %v48 = vxor.u32 %v44, %v46
    %v49 = vmul.u32 %v47, 2146121005
    %v50 = vmul.u32 %v48, 2146121005
    %v51 = vshrl.u32 %v49, 15
    %v52 = vshrl.u32 %v50, 15
    %v53 = vxor.u32 %v49, %v51
    %v54 = vxor.u32 %v50, %v52
    %v55 = vmul.u32 %v53, 2221713035
    %v56 = vmul.u32 %v54, 2221713035
    %v57 = vshrl.u32 %v55, 16
    %v58 = vshrl.u32 %v56, 16
    %v59 = vxor.u32 %v55, %v57
    %v60 = vxor.u32 %v56, %v58
    %v61 = vshrl.u32 %v59, 16
    %v62 = vshrl.u32 %v60, 16
    %v63 = vxor.u32 %v59, %v61
    %v64 = vxor.u32 %v60, %v62
    %v65 = vmul.u32 %v63, 2246822507
    %v66 = vmul.u32 %v64, 2246822507
    %v67 = vshrl.u32 %v65, 15
    %v68 = vshrl.u32 %v66, 15
    %v69 = vxor.u32 %v65, %v67
    %v70 = vxor.u32 %v66, %v68
    %v71 = vmul.u32 %v69, 3266489909
    %v72 = vmul.u32 %v70, 3266489909
    %v73 = vshrl.u32 %v71, 16
    %v74 = vshrl.u32 %v72, 16
    %v75 = vxor.u32 %v71, %v73
    %v76 = vxor.u32 %v72, %v74
    %v77 = vshrl.u32 %v75, 8
    %v78 = vshrl.u32 %v76, 8
    %v79 = vcvt.s32.f32 %v77
    %v80 = vcvt.s32.f32 %v78
    %v81 = vmul.f32 %v79, 5.9604645e-08
    %v82 = vmul.f32 %v80, 5.9604645e-08
    %v83 = vld [vmem:[#allocation3] sm:$0xff]
    %v84 = vld [vmem:[#allocation3 + $0x8] sm:$0xff]
    %vm85 = vcmp.le.f32.partialorder %v81, %v83
    %vm86 = vcmp.le.f32.partialorder %v82, %v84
    %v87 = vsel %vm85, 1, 0
    %v88 = vsel %vm86, 1, 0
    %v89 = vcvt.s32.f32 %v87
    %v90 = vcvt.s32.f32 %v88
    %91 = vst [vmem:[#allocation6] sm:$0xff] %v89
    %92 = vst [vmem:[#allocation6 + $0x8] sm:$0xff] %v90
    // Predicated region
    $region14: #{tpu_custom_call.1} parent=1 // pred_check
      _
    $region15: #{tpu_custom_call.1} parent=1 // pred_check_branch
      %94 = sbr.rel (0) target = $region17
    $region16: #{tpu_custom_call.1} parent=1 // pred_region
      %s96 = ssub.s32 256, 256
      %97 = vsyncadd [#allocation5], %s96
      %s98 = sshll.u32 [#allocation6], 4
      %s99 = int_to_ptr.vmem [resolvable:$true] %s98
      %104 = dma.vmem_to_hbm [thread:$0]  %s99, 256, %s2, [#allocation5], 128, 128, 8
    $region17: #{tpu_custom_call.1} parent=1 // pred_fallthru
      _
    // Predicated region
    $region18: #{tpu_custom_call.1} parent=1 // pred_check
      _
    $region19: #{tpu_custom_call.1} parent=1 // pred_check_branch
      %106 = sbr.rel (0) target = $region21
    $region20: #{tpu_custom_call.1} parent=1 // pred_region
      %107 = dma.done [#allocation5], 256
    $region21: #{tpu_custom_call.1} parent=1 // pred_fallthru
      _
    %108 = vsyncpa [#allocation4], 1
    %109 = vsyncpa [#allocation5], 1

</llo_original>
